<compile_context>
chip_gen: v7x
topology: tpu7x:2x2x1
jax: 0.10.0
libtpu: 0.0.40
codegen_flags: <defaults>
</compile_context>

<pallas_src>
import functools

import jax
import jax.numpy as jnp
from jax.experimental import pallas as pl
from jax.experimental.pallas import tpu as pltpu


def _round_up(x, m):
    return (x + m - 1) // m * m


def _cdiv(a, b):
    return (a + b - 1) // b


# ---------------------------------------------------------------------------
# Kernels
# ---------------------------------------------------------------------------
def _make_kernel(has_t, vpu_t, use_bf16):
    def _mm(a, b):
        if use_bf16:
            a = a.astype(jnp.bfloat16)
            b = b.astype(jnp.bfloat16)
        return jnp.dot(a, b, preferred_element_type=jnp.float32)

    if has_t:
        def kernel(x_ref, t_ref, w1x_ref, w1t_ref, b1_ref,
                   w2_ref, b2_ref, w3_ref, b3_ref, o_ref):
            # h = tanh(lin_1(concat(x, t)))  -- concat replaced by a split matmul.
            acc = _mm(x_ref[...], w1x_ref[...]) + b1_ref[...]
            if vpu_t:
                # t has only a few columns: rank-1 broadcast MACs on the VPU
                # instead of a K=1 MXU matmul (MXU pushes saved, VPU has slack).
                t = t_ref[...]
                w1t = w1t_ref[...]
                for k in range(t.shape[1]):
                    acc = acc + t[:, k:k + 1] * w1t[k:k + 1, :]
            else:
                acc = acc + _mm(t_ref[...], w1t_ref[...])
            h = jnp.tanh(acc)
            # h = h + tanh(lin_2(h))
            h = h + jnp.tanh(_mm(h, w2_ref[...]) + b2_ref[...])
            # y_hat = lin_3(h)  -- stored at true out_dim width (no lane padding)
            o_ref[...] = (_mm(h, w3_ref[...]) + b3_ref[...]).astype(o_ref.dtype)
        return kernel

    def kernel(x_ref, w1_ref, b1_ref, w2_ref, b2_ref, w3_ref, b3_ref, o_ref):
        h = jnp.tanh(_mm(x_ref[...], w1_ref[...]) + b1_ref[...])
        h = h + jnp.tanh(_mm(h, w2_ref[...]) + b2_ref[...])
        o_ref[...] = (_mm(h, w3_ref[...]) + b3_ref[...]).astype(o_ref.dtype)
    return kernel


# ---------------------------------------------------------------------------
# Wrapper
# ---------------------------------------------------------------------------
@functools.partial(jax.jit, static_argnames=("tile_b", "use_bf16"))
def _mlp_forward_impl(x, params, t, tile_b, use_bf16):
    w1, b1, w2, b2, w3, b3 = params
    batch, x_dim = x.shape
    hidden = w1.shape[1]
    out_dim = w3.shape[1]
    t_dim = 0 if t is None else t.shape[1]
    in_dim = x_dim + t_dim

    # --- batch tiling: no row padding, Pallas handles the ragged last block ---
    tile_b = max(8, min(_round_up(tile_b, 8), _round_up(batch, 8)))
    if batch >= 16:
        # Keep at least 2 grid steps so the "parallel" batch axis can shard
        # across both TensorCores on v7x (harmless on v5e/v6e).
        tile_b = min(tile_b, _round_up(_cdiv(batch, 2), 8))
    grid = (_cdiv(batch, tile_b),)

    # Activations stream over the batch grid; weights/biases are resident
    # (constant index_map) and single-buffered.
    def act_spec(d):
        return pl.BlockSpec((tile_b, d), lambda i: (i, 0))

    def res_spec(a):
        return pl.BlockSpec(a.shape, lambda i: (0, 0),
                            pipeline_mode=pl.Buffered(1))

    # --- VMEM budget: 2x (double-buffered) I/O tiles + weights + temps -------
    itemsize = 4
    io_bytes = 2 * tile_b * (in_dim + out_dim) * itemsize
    wt_bytes = sum(int(a.size) * itemsize for a in (w1, b1, w2, b2, w3, b3))
    mid_bytes = 4 * tile_b * hidden * itemsize
    vmem_limit = int(min(max(io_bytes + wt_bytes + mid_bytes + (4 << 20), 8 << 20),
                         40 << 20))  # conservative vs v7x's 64 MiB physical VMEM

    cp = pltpu.CompilerParams(
        dimension_semantics=("parallel",),
        vmem_limit_bytes=vmem_limit,
    )

    cost = pl.CostEstimate(
        flops=2 * batch * (in_dim * hidden + hidden * hidden + hidden * out_dim),
        transcendentals=2 * batch * hidden,
        bytes_accessed=itemsize * (batch * (in_dim + out_dim)
                                   + sum(int(a.size) for a in (w1, b1, w2, b2, w3, b3))),
    )

    out_shape = jax.ShapeDtypeStruct((batch, out_dim), jnp.float32)

    if t is not None:
        # Split first-layer weights instead of concatenating activations.
        w1x = w1[:x_dim]
        w1t = w1[x_dim:]
        kernel = _make_kernel(True, t_dim <= 4, use_bf16)
        out = pl.pallas_call(
            kernel,
            out_shape=out_shape,
            grid=grid,
            in_specs=[
                act_spec(x_dim), act_spec(t_dim),
                res_spec(w1x), res_spec(w1t), res_spec(b1),
                res_spec(w2), res_spec(b2),
                res_spec(w3), res_spec(b3),
            ],
            out_specs=act_spec(out_dim),
            compiler_params=cp,
            cost_estimate=cost,
        )(x, t, w1x, w1t, b1, w2, b2, w3, b3)
    else:
        kernel = _make_kernel(False, False, use_bf16)
        out = pl.pallas_call(
            kernel,
            out_shape=out_shape,
            grid=grid,
            in_specs=[
                act_spec(x_dim),
                res_spec(w1), res_spec(b1),
                res_spec(w2), res_spec(b2),
                res_spec(w3), res_spec(b3),
            ],
            out_specs=act_spec(out_dim),
            compiler_params=cp,
            cost_estimate=cost,
        )(x, w1, b1, w2, b2, w3, b3)

    return out


def mlp_forward(x, params, t=None, tile_b=4096, use_bf16=False):
    """Pallas-backed forward matching MLP.forward(x, t).

    tile_b: batch-tile rows per grid step (multiple of 8); large tiles amortize
    the ~0.35 us per-grid-step overhead and are clamped to the batch.
    use_bf16: optional bf16 MXU inputs (f32 accumulation); off by default to
    match the f32 reference to 1e-5 tolerance.
    """
    return _mlp_forward_impl(x, params, t, tile_b=int(tile_b),
                             use_bf16=bool(use_bf16))


# ---------------------------------------------------------------------------
# Params / reference
# ---------------------------------------------------------------------------
def init_params(key, input_dim, output_dim, hidden_dim):
    """Deterministic parameter init (PyTorch Linear shapes, stored transposed)."""
    ks = jax.random.split(key, 6)

    def lin(kw, kb, fan_in, fan_out):
        bound = 1.0 / jnp.sqrt(fan_in)
        w = jax.random.uniform(kw, (fan_in, fan_out), jnp.float32, -bound, bound)
        b = jax.random.uniform(kb, (1, fan_out), jnp.float32, -bound, bound)
        return w, b

    w1, b1 = lin(ks[0], ks[1], input_dim, hidden_dim)
    w2, b2 = lin(ks[2], ks[3], hidden_dim, hidden_dim)
    w3, b3 = lin(ks[4], ks[5], hidden_dim, output_dim)
    return (w1, b1, w2, b2, w3, b3)


def mlp_reference(x, params, t=None):
    """Pure-JAX reference for correctness check."""
    inputs = jnp.concatenate([x, t], axis=-1) if t is not None else x
    w1, b1, w2, b2, w3, b3 = params
    h = jnp.tanh(inputs @ w1 + b1)
    h = h + jnp.tanh(h @ w2 + b2)
    return h @ w3 + b3


if __name__ == "__main__":
    # Small shapes: batch=8, x has 3 features, t has 1 feature -> input_dim=4,
    # hidden_dim=32, output_dim=2.
    input_dim, output_dim, hidden_dim = 4, 2, 32
    batch = 8

    key = jax.random.PRNGKey(0)
    kx, kt, kp = jax.random.split(key, 3)
    x = jax.random.normal(kx, (batch, 3), jnp.float32)
    t = jax.random.normal(kt, (batch, 1), jnp.float32)
    params = init_params(kp, input_dim, output_dim, hidden_dim)

    # With t (split first-layer matmul + VPU rank-1 t-contribution path)
    y = mlp_forward(x, params, t)
    jax.block_until_ready(y)
    y_ref = mlp_reference(x, params, t)
    assert y.shape == y_ref.shape
    assert jnp.allclose(y, y_ref, atol=1e-5, rtol=1e-5)

    # Without t (x already has input_dim features)
    x_full = jax.random.normal(kx, (batch, input_dim), jnp.float32)
    y2 = mlp_forward(x_full, params)
    jax.block_until_ready(y2)
    y2_ref = mlp_reference(x_full, params)
    assert jnp.allclose(y2, y2_ref, atol=1e-5, rtol=1e-5)

    # Multi-tile grid + ragged batch (exercises the clipped partial last block
    # and the >=2-grid-step split for the parallel batch axis).
    kx2, kt2 = jax.random.split(kt)
    x3 = jax.random.normal(kx2, (200, 3), jnp.float32)
    t3 = jax.random.normal(kt2, (200, 1), jnp.float32)
    y3 = mlp_forward(x3, params, t3, tile_b=64)
    jax.block_until_ready(y3)
    y3_ref = mlp_reference(x3, params, t3)
    assert jnp.allclose(y3, y3_ref, atol=1e-5, rtol=1e-5)

    # Same ragged batch with the large default tile (grid of 2 blocks).
    y4 = mlp_forward(x3, params, t3)
    jax.block_until_ready(y4)
    assert jnp.allclose(y4, y3_ref, atol=1e-5, rtol=1e-5)

    print("KERNEL_OK")
</pallas_src>

<mosaic_0001>
module attributes {stable_mosaic.version = 11 : i64} {
  func.func @kernel(%arg0: i32, %arg1: memref<8x3xf32, #tpu.memory_space<vmem>>, %arg2: memref<8x1xf32, #tpu.memory_space<vmem>>, %arg3: memref<3x32xf32, #tpu.memory_space<vmem>>, %arg4: memref<1x32xf32, #tpu.memory_space<vmem>>, %arg5: memref<1x32xf32, #tpu.memory_space<vmem>>, %arg6: memref<32x32xf32, #tpu.memory_space<vmem>>, %arg7: memref<1x32xf32, #tpu.memory_space<vmem>>, %arg8: memref<32x2xf32, #tpu.memory_space<vmem>>, %arg9: memref<1x2xf32, #tpu.memory_space<vmem>>, %arg10: memref<8x2xf32, #tpu.memory_space<vmem>>) attributes {dimension_semantics = [#tpu.dimension_semantics<parallel>], iteration_bounds = array<i64: 1>, scalar_prefetch = 0 : i64, scratch_operands = 0 : i64, tpu.core_type = #tpu.core_type<tc>, window_params = [{transform_indices = @transform_0, window_bounds = array<i64: 8, 3>}, {transform_indices = @transform_1, window_bounds = array<i64: 8, 1>}, {pipeline_mode = #tpu.pipeline_mode<synchronous>, transform_indices = @transform_2, window_bounds = array<i64: 3, 32>}, {pipeline_mode = #tpu.pipeline_mode<synchronous>, transform_indices = @transform_3, window_bounds = array<i64: 1, 32>}, {pipeline_mode = #tpu.pipeline_mode<synchronous>, transform_indices = @transform_4, window_bounds = array<i64: 1, 32>}, {pipeline_mode = #tpu.pipeline_mode<synchronous>, transform_indices = @transform_5, window_bounds = array<i64: 32, 32>}, {pipeline_mode = #tpu.pipeline_mode<synchronous>, transform_indices = @transform_6, window_bounds = array<i64: 1, 32>}, {pipeline_mode = #tpu.pipeline_mode<synchronous>, transform_indices = @transform_7, window_bounds = array<i64: 32, 2>}, {pipeline_mode = #tpu.pipeline_mode<synchronous>, transform_indices = @transform_8, window_bounds = array<i64: 1, 2>}, {transform_indices = @transform_9, window_bounds = array<i64: 8, 2>}]} {
    %c0 = arith.constant 0 : index
    %c0_0 = arith.constant 0 : index
    %0 = vector.load %arg1[%c0, %c0_0] : memref<8x3xf32, #tpu.memory_space<vmem>>, vector<8x3xf32>
    %c0_1 = arith.constant 0 : index
    %c0_2 = arith.constant 0 : index
    %1 = vector.load %arg3[%c0_1, %c0_2] : memref<3x32xf32, #tpu.memory_space<vmem>>, vector<3x32xf32>
    %cst = arith.constant dense<0.000000e+00> : vector<8x32xf32>
    %2 = tpu.matmul %0, %1, %cst {dimension_numbers = #tpu.dot_dimension_numbers<[1], [0], [0], [1], [0, 0, 1, 1], [], []>} : vector<8x3xf32>, vector<3x32xf32>, vector<8x32xf32> -> vector<8x32xf32>
    %c0_3 = arith.constant 0 : index
    %c0_4 = arith.constant 0 : index
    %3 = vector.load %arg5[%c0_3, %c0_4] : memref<1x32xf32, #tpu.memory_space<vmem>>, vector<1x32xf32>
    %4 = vector.broadcast %3 : vector<1x32xf32> to vector<8x32xf32>
    %5 = arith.addf %2, %4 : vector<8x32xf32>
    %c0_5 = arith.constant 0 : index
    %c0_6 = arith.constant 0 : index
    %6 = vector.load %arg2[%c0_5, %c0_6] : memref<8x1xf32, #tpu.memory_space<vmem>>, vector<8x1xf32>
    %c0_7 = arith.constant 0 : index
    %c0_8 = arith.constant 0 : index
    %7 = vector.load %arg4[%c0_7, %c0_8] : memref<1x32xf32, #tpu.memory_space<vmem>>, vector<1x32xf32>
    %8 = vector.broadcast %6 : vector<8x1xf32> to vector<8x32xf32>
    %9 = vector.broadcast %7 : vector<1x32xf32> to vector<8x32xf32>
    %10 = arith.mulf %8, %9 : vector<8x32xf32>
    %11 = arith.addf %5, %10 : vector<8x32xf32>
    %12 = math.tanh %11 : vector<8x32xf32>
    %c0_9 = arith.constant 0 : index
    %c0_10 = arith.constant 0 : index
    %13 = vector.load %arg6[%c0_9, %c0_10] : memref<32x32xf32, #tpu.memory_space<vmem>>, vector<32x32xf32>
    %cst_11 = arith.constant dense<0.000000e+00> : vector<8x32xf32>
    %14 = tpu.matmul %12, %13, %cst_11 {dimension_numbers = #tpu.dot_dimension_numbers<[1], [0], [0], [1], [0, 0, 1, 1], [], []>} : vector<8x32xf32>, vector<32x32xf32>, vector<8x32xf32> -> vector<8x32xf32>
    %c0_12 = arith.constant 0 : index
    %c0_13 = arith.constant 0 : index
    %15 = vector.load %arg7[%c0_12, %c0_13] : memref<1x32xf32, #tpu.memory_space<vmem>>, vector<1x32xf32>
    %16 = vector.broadcast %15 : vector<1x32xf32> to vector<8x32xf32>
    %17 = arith.addf %14, %16 : vector<8x32xf32>
    %18 = math.tanh %17 : vector<8x32xf32>
    %19 = arith.addf %12, %18 : vector<8x32xf32>
    %c0_14 = arith.constant 0 : index
    %c0_15 = arith.constant 0 : index
    %20 = vector.load %arg8[%c0_14, %c0_15] : memref<32x2xf32, #tpu.memory_space<vmem>>, vector<32x2xf32>
    %cst_16 = arith.constant dense<0.000000e+00> : vector<8x2xf32>
    %21 = tpu.matmul %19, %20, %cst_16 {dimension_numbers = #tpu.dot_dimension_numbers<[1], [0], [0], [1], [0, 0, 1, 1], [], []>} : vector<8x32xf32>, vector<32x2xf32>, vector<8x2xf32> -> vector<8x2xf32>
    %c0_17 = arith.constant 0 : index
    %c0_18 = arith.constant 0 : index
    %22 = vector.load %arg9[%c0_17, %c0_18] : memref<1x2xf32, #tpu.memory_space<vmem>>, vector<1x2xf32>
    %23 = vector.broadcast %22 : vector<1x2xf32> to vector<8x2xf32>
    %24 = arith.addf %21, %23 : vector<8x2xf32>
    %c0_19 = arith.constant 0 : index
    %c0_20 = arith.constant 0 : index
    %25 = vector.load %arg10[%c0_19, %c0_20] : memref<8x2xf32, #tpu.memory_space<vmem>>, vector<8x2xf32>
    tpu.vector_store %arg10[%c0_19, %c0_20], %24 {strides = array<i32>} : memref<8x2xf32, #tpu.memory_space<vmem>>, vector<8x2xf32>,
    return
  }
  func.func @transform_0(%arg0: i32) -> (i32, i32) {
    %c0_i32 = arith.constant 0 : i32
    %c0_i32_0 = arith.constant 0 : i32
    return %arg0, %c0_i32 : i32, i32
  }
  func.func @transform_1(%arg0: i32) -> (i32, i32) {
    %c0_i32 = arith.constant 0 : i32
    %c0_i32_0 = arith.constant 0 : i32
    return %arg0, %c0_i32 : i32, i32
  }
  func.func @transform_2(%arg0: i32) -> (i32, i32) {
    %c0_i32 = arith.constant 0 : i32
    %c0_i32_0 = arith.constant 0 : i32
    %c0_i32_1 = arith.constant 0 : i32
    return %c0_i32, %c0_i32_0 : i32, i32
  }
  func.func @transform_3(%arg0: i32) -> (i32, i32) {
    %c0_i32 = arith.constant 0 : i32
    %c0_i32_0 = arith.constant 0 : i32
    %c0_i32_1 = arith.constant 0 : i32
    return %c0_i32, %c0_i32_0 : i32, i32
  }
  func.func @transform_4(%arg0: i32) -> (i32, i32) {
    %c0_i32 = arith.constant 0 : i32
    %c0_i32_0 = arith.constant 0 : i32
    %c0_i32_1 = arith.constant 0 : i32
    return %c0_i32, %c0_i32_0 : i32, i32
  }
  func.func @transform_5(%arg0: i32) -> (i32, i32) {
    %c0_i32 = arith.constant 0 : i32
    %c0_i32_0 = arith.constant 0 : i32
    %c0_i32_1 = arith.constant 0 : i32
    return %c0_i32, %c0_i32_0 : i32, i32
  }
  func.func @transform_6(%arg0: i32) -> (i32, i32) {
    %c0_i32 = arith.constant 0 : i32
    %c0_i32_0 = arith.constant 0 : i32
    %c0_i32_1 = arith.constant 0 : i32
    return %c0_i32, %c0_i32_0 : i32, i32
  }
  func.func @transform_7(%arg0: i32) -> (i32, i32) {
    %c0_i32 = arith.constant 0 : i32
    %c0_i32_0 = arith.constant 0 : i32
    %c0_i32_1 = arith.constant 0 : i32
    return %c0_i32, %c0_i32_0 : i32, i32
  }
  func.func @transform_8(%arg0: i32) -> (i32, i32) {
    %c0_i32 = arith.constant 0 : i32
    %c0_i32_0 = arith.constant 0 : i32
    %c0_i32_1 = arith.constant 0 : i32
    return %c0_i32, %c0_i32_0 : i32, i32
  }
  func.func @transform_9(%arg0: i32) -> (i32, i32) {
    %c0_i32 = arith.constant 0 : i32
    %c0_i32_0 = arith.constant 0 : i32
    return %arg0, %c0_i32 : i32, i32
  }
}

</mosaic_0001>

<llo_original>
// kernel: _mlp_forward_impl.1
$region0: #{_mlp_forward_impl.1}
  #allocation0 [shape = 'u32[]', space=smem, size = 0x4, offset = 0x4, fixed_abs, tag = 'smem constant byte address 0x4 - core index']
  #allocation1 [shape = 'u32[144,128]{1,0:T(1,128)}', space=vmem, size = 0x12000, scoped, tag = 'internal scratch']
  %s0 = inlined_call_operand.vmem [shape: f32[8,3], index: 0, kind: input, shape index: {}]
  %s1 = inlined_call_operand.vmem [shape: f32[8,1], index: 1, kind: input, shape index: {}]
  %s2 = inlined_call_operand.vmem [shape: f32[3,32], index: 2, kind: input, shape index: {}]
  %s3 = inlined_call_operand.vmem [shape: f32[1,32], index: 3, kind: input, shape index: {}]
  %s4 = inlined_call_operand.vmem [shape: f32[1,32], index: 4, kind: input, shape index: {}]
  %s5 = inlined_call_operand.vmem [shape: f32[32,32], index: 5, kind: input, shape index: {}]
  %s6 = inlined_call_operand.vmem [shape: f32[1,32], index: 6, kind: input, shape index: {}]
  %s7 = inlined_call_operand.vmem [shape: f32[32,2], index: 7, kind: input, shape index: {}]
  %s8 = inlined_call_operand.vmem [shape: f32[1,2], index: 8, kind: input, shape index: {}]
  %s9 = inlined_call_operand.vmem [shape: f32[8,2], index: 9, kind: output, shape index: {}]
  %s10 = sld [smem:[#allocation0]]
  $region46: #{_mlp_forward_impl.1} parent=0
    _
  %s12 = ssub.s32 1, %s10
  %s13 = scalar_select 0, %s12, %s10
  // Predicated region
  $region2: #{_mlp_forward_impl.1} parent=0 // pred_check
    _
  $region3: #{_mlp_forward_impl.1} parent=0 // pred_check_branch
    %15 = sbr.rel (0) target = $region5
  $region4: #{_mlp_forward_impl.1} parent=0 // pred_region
    _
  $region5: #{_mlp_forward_impl.1} parent=0 // pred_fallthru
    _
  // Predicated region
  $region6: #{_mlp_forward_impl.1} parent=0 // pred_check
    _
  $region7: #{_mlp_forward_impl.1} parent=0 // pred_check_branch
    %17 = sbr.rel (0) target = $region9
  $region8: #{_mlp_forward_impl.1} parent=0 // pred_region
    _
  $region9: #{_mlp_forward_impl.1} parent=0 // pred_fallthru
    _
  // Predicated region
  $region10: #{_mlp_forward_impl.1} parent=0 // pred_check
    _
  $region11: #{_mlp_forward_impl.1} parent=0 // pred_check_branch
    %19 = sbr.rel (0) target = $region13
  $region12: #{_mlp_forward_impl.1} parent=0 // pred_region
    _
  $region13: #{_mlp_forward_impl.1} parent=0 // pred_fallthru
    _
  // Predicated region
  $region14: #{_mlp_forward_impl.1} parent=0 // pred_check
    _
  $region15: #{_mlp_forward_impl.1} parent=0 // pred_check_branch
    %21 = sbr.rel (0) target = $region17
  $region16: #{_mlp_forward_impl.1} parent=0 // pred_region
    _
  $region17: #{_mlp_forward_impl.1} parent=0 // pred_fallthru
    _
  // Predicated region
  $region18: #{_mlp_forward_impl.1} parent=0 // pred_check
    _
  $region19: #{_mlp_forward_impl.1} parent=0 // pred_check_branch
    %23 = sbr.rel (0) target = $region21
  $region20: #{_mlp_forward_impl.1} parent=0 // pred_region
    _
  $region21: #{_mlp_forward_impl.1} parent=0 // pred_fallthru
    _
  // Predicated region
  $region22: #{_mlp_forward_impl.1} parent=0 // pred_check
    _
  $region23: #{_mlp_forward_impl.1} parent=0 // pred_check_branch
    %25 = sbr.rel (0) target = $region25
  $region24: #{_mlp_forward_impl.1} parent=0 // pred_region
    _
  $region25: #{_mlp_forward_impl.1} parent=0 // pred_fallthru
    _
  // Predicated region
  $region26: #{_mlp_forward_impl.1} parent=0 // pred_check
    _
  $region27: #{_mlp_forward_impl.1} parent=0 // pred_check_branch
    %27 = sbr.rel (0) target = $region29
  $region28: #{_mlp_forward_impl.1} parent=0 // pred_region
    _
  $region29: #{_mlp_forward_impl.1} parent=0 // pred_fallthru
    _
  // Predicated region
  $region30: #{_mlp_forward_impl.1} parent=0 // pred_check
    _
  $region31: #{_mlp_forward_impl.1} parent=0 // pred_check_branch
    %29 = sbr.rel (0) target = $region33
  $region32: #{_mlp_forward_impl.1} parent=0 // pred_region
    _
  $region33: #{_mlp_forward_impl.1} parent=0 // pred_fallthru
    _
  // Predicated region
  $region34: #{_mlp_forward_impl.1} parent=0 // pred_check
    _
  $region35: #{_mlp_forward_impl.1} parent=0 // pred_check_branch
    %31 = sbr.rel (0) target = $region37
  $region36: #{_mlp_forward_impl.1} parent=0 // pred_region
    _
  $region37: #{_mlp_forward_impl.1} parent=0 // pred_fallthru
    _
  %v32 = vld [vmem:[%s0] sm:$0xff]
  %v33 = vld [vmem:[%s2] sm:$0x7]
  %v34 = vld [vmem:[%s4] sm:$0x1]
  %v36 = vlaneseq
  %v37 = vshrl.u32 %v36, 7
  %v38 = vsub.s32 0, %v37
  %v39 = vrot.slane %v34, %v38
  %vm41 = vcmask 23552
  %v43 = vsel %vm41, %v32, 0
  %vm45 = vcmask 1042432
  %v47 = vsel %vm45, %v33, 0
  %49 = vmatprep.subr.mxu0 0.0
  %50 = vmatpush1.msra.mxu0 %v47
  %51 = vmatprep.subr.mxu0 0.0
  %52 = vmatpush1.msra.mxu0 0.0
  %53 = vmatprep.subr.mxu0 0.0
  %54 = vmatpush1.msra.mxu0 0.0
  %55 = vmatprep.subr.mxu0 0.0
  %56 = vmatpush1.msra.mxu0 0.0
  %57 = vmatprep.subr.mxu0 0.0
  %58 = vmatpush1.msra.mxu0 0.0
  %59 = vmatprep.subr.mxu0 0.0
  %60 = vmatpush1.msra.mxu0 0.0
  %61 = vmatprep.subr.mxu0 0.0
  %62 = vmatpush1.msra.mxu0 0.0
  %63 = vmatprep.subr.mxu0 0.0
  %64 = vmatpush1.msra.mxu0 0.0
  %65 = vmatprep.subr.mxu0 0.0
  %66 = vmatpush1.msra.mxu0 0.0
  %67 = vmatprep.subr.mxu0 0.0
  %68 = vmatpush1.msra.mxu0 0.0
  %69 = vmatprep.subr.mxu0 0.0
  %70 = vmatpush1.msra.mxu0 0.0
  %71 = vmatprep.subr.mxu0 0.0
  %72 = vmatpush1.msra.mxu0 0.0
  %73 = vmatprep.subr.mxu0 0.0
  %74 = vmatpush1.msra.mxu0 0.0
  %75 = vmatprep.subr.mxu0 0.0
  %76 = vmatpush1.msra.mxu0 0.0
  %77 = vmatprep.subr.mxu0 0.0
  %78 = vmatpush1.msra.mxu0 0.0
  %79 = vmatprep.subr.mxu0 0.0
  %80 = vmatpush1.msra.mxu0 0.0
  %81 = vmatprep.subr.mxu0 0.0
  %82 = vmatpush1.msra.mxu0 0.0
  %83 = vmatprep.subr.mxu0 0.0
  %84 = vmatpush1.msra.mxu0 0.0
  %85 = vmatprep.subr.mxu0 0.0
  %86 = vmatpush1.msra.mxu0 0.0
  %87 = vmatprep.subr.mxu0 0.0
  %88 = vmatpush1.msra.mxu0 0.0
  %89 = vmatprep.subr.mxu0 0.0
  %90 = vmatpush1.msra.mxu0 0.0
  %91 = vmatprep.subr.mxu0 0.0
  %92 = vmatpush1.msra.mxu0 0.0
  %93 = vmatprep.subr.mxu0 0.0
  %94 = vmatpush1.msra.mxu0 0.0
  %95 = vmatprep.subr.mxu0 0.0
  %96 = vmatpush1.msra.mxu0 0.0
  %97 = vmatprep.subr.mxu0 0.0
  %98 = vmatpush1.msra.mxu0 0.0
  %99 = vmatprep.subr.mxu0 0.0
  %100 = vmatpush1.msra.mxu0 0.0
  %101 = vmatprep.subr.mxu0 0.0
  %102 = vmatpush1.msra.mxu0 0.0
  %103 = vmatprep.subr.mxu0 0.0
  %104 = vmatpush1.msra.mxu0 0.0
  %105 = vmatprep.subr.mxu0 0.0
  %106 = vmatpush1.msra.mxu0 0.0
  %107 = vmatprep.subr.mxu0 0.0
  %108 = vmatpush1.msra.mxu0 0.0
  %109 = vmatprep.subr.mxu0 0.0
  %110 = vmatpush1.msra.mxu0 0.0
  %111 = vmatprep.subr.mxu0 0.0
  %112 = vmatpush1.msra.mxu0 0.0
  %113 = vmatprep.mubr.f32.mxu0 0.0
  %114 = vmatmul.mubr.f32.gmra.mrb[0].mxu0 %v43
  %v115 = vpop.f32.mrb[0].mxu0
  %v116 = vadd.f32 %v39, %v115
  %v117 = vpop.f32.mrb[0].mxu0
  %118 = vdwg.mxu0
  %v119 = vld [vmem:[%s1] sm:$0xff]
  %v120 = vld [vmem:[%s3] sm:$0x1]
  %122 = vset.pattern.permute.xlu0 0
  %123 = vperm.xlu0 %122, %v119
  %v124 = vpop.permute.xlu0 %123
  %v127 = vlaneseq
  %v128 = vshrl.u32 %v127, 7
  %v129 = vsub.s32 0, %v128
  %v130 = vrot.slane %v120, %v129
  %v132 = vmul.f32 %v124, %v130
  %v133 = vadd.f32 %v116, %v132
  %v134 = vtanh.pop %v133
  %v135 = vld [vmem:[%s5] sm:$0xff]
  %v136 = vld [vmem:[%s5 + $0x8] sm:$0xff]
  %v137 = vld [vmem:[%s5 + $0x10] sm:$0xff]
  %v138 = vld [vmem:[%s5 + $0x18] sm:$0xff]
  %v139 = vld [vmem:[%s6] sm:$0x1]
  %v141 = vlaneseq
  %v142 = vshrl.u32 %v141, 7
  %v143 = vsub.s32 0, %v142
  %v144 = vrot.slane %v139, %v143
  %vm146 = vcmask 261120
  %v148 = vsel %vm146, %v134, 0
  %150 = vmatprep.subr.mxu0 0.0
  %151 = vmatpush1.msra.mxu0 %v135
  %152 = vmatprep.subr.mxu0 0.0
  %153 = vmatpush1.msra.mxu0 %v136
  %154 = vmatprep.subr.mxu0 0.0
  %155 = vmatpush1.msra.mxu0 %v137
  %156 = vmatprep.subr.mxu0 0.0
  %157 = vmatpush1.msra.mxu0 %v138
  %158 = vmatprep.subr.mxu0 0.0
  %159 = vmatpush1.msra.mxu0 0.0
  %160 = vmatprep.subr.mxu0 0.0
  %161 = vmatpush1.msra.mxu0 0.0
  %162 = vmatprep.subr.mxu0 0.0
  %163 = vmatpush1.msra.mxu0 0.0
  %164 = vmatprep.subr.mxu0 0.0
  %165 = vmatpush1.msra.mxu0 0.0
  %166 = vmatprep.subr.mxu0 0.0
  %167 = vmatpush1.msra.mxu0 0.0
  %168 = vmatprep.subr.mxu0 0.0
  %169 = vmatpush1.msra.mxu0 0.0
  %170 = vmatprep.subr.mxu0 0.0
  %171 = vmatpush1.msra.mxu0 0.0
  %172 = vmatprep.subr.mxu0 0.0
  %173 = vmatpush1.msra.mxu0 0.0
  %174 = vmatprep.subr.mxu0 0.0
  %175 = vmatpush1.msra.mxu0 0.0
  %176 = vmatprep.subr.mxu0 0.0
  %177 = vmatpush1.msra.mxu0 0.0
  %178 = vmatprep.subr.mxu0 0.0
  %179 = vmatpush1.msra.mxu0 0.0
  %180 = vmatprep.subr.mxu0 0.0
  %181 = vmatpush1.msra.mxu0 0.0
  %182 = vmatprep.subr.mxu0 0.0
  %183 = vmatpush1.msra.mxu0 0.0
  %184 = vmatprep.subr.mxu0 0.0
  %185 = vmatpush1.msra.mxu0 0.0
  %186 = vmatprep.subr.mxu0 0.0
  %187 = vmatpush1.msra.mxu0 0.0
  %188 = vmatprep.subr.mxu0 0.0
  %189 = vmatpush1.msra.mxu0 0.0
  %190 = vmatprep.subr.mxu0 0.0
  %191 = vmatpush1.msra.mxu0 0.0
  %192 = vmatprep.subr.mxu0 0.0
  %193 = vmatpush1.msra.mxu0 0.0
  %194 = vmatprep.subr.mxu0 0.0
  %195 = vmatpush1.msra.mxu0 0.0
  %196 = vmatprep.subr.mxu0 0.0
  %197 = vmatpush1.msra.mxu0 0.0
  %198 = vmatprep.subr.mxu0 0.0
  %199 = vmatpush1.msra.mxu0 0.0
  %200 = vmatprep.subr.mxu0 0.0
  %201 = vmatpush1.msra.mxu0 0.0
  %202 = vmatprep.subr.mxu0 0.0
  %203 = vmatpush1.msra.mxu0 0.0
  %204 = vmatprep.subr.mxu0 0.0
  %205 = vmatpush1.msra.mxu0 0.0
  %206 = vmatprep.subr.mxu0 0.0
  %207 = vmatpush1.msra.mxu0 0.0
  %208 = vmatprep.subr.mxu0 0.0
  %209 = vmatpush1.msra.mxu0 0.0
  %210 = vmatprep.subr.mxu0 0.0
  %211 = vmatpush1.msra.mxu0 0.0
  %212 = vmatprep.subr.mxu0 0.0
  %213 = vmatpush1.msra.mxu0 0.0
  %214 = vmatprep.mubr.f32.mxu0 0.0
  %215 = vmatmul.mubr.f32.gmra.mrb[0].mxu0 %v148
  %v216 = vpop.f32.mrb[0].mxu0
  %v217 = vadd.f32 %v144, %v216
  %v218 = vpop.f32.mrb[0].mxu0
  %219 = vdwg.mxu0
  %v220 = vtanh.pop %v217
  %v221 = vadd.f32 %v134, %v220
  %v222 = vld [vmem:[%s7] sm:$0xff]
  %v223 = vld [vmem:[%s7 + $0x8] sm:$0xff]
  %v224 = vld [vmem:[%s7 + $0x10] sm:$0xff]
  %v225 = vld [vmem:[%s7 + $0x18] sm:$0xff]
  %v226 = vld [vmem:[%s8] sm:$0x1]
  %v228 = vlaneseq
  %v229 = vshrl.u32 %v228, 7
  %v230 = vsub.s32 0, %v229
  %v231 = vrot.slane %v226, %v230
  %v234 = vsel %vm146, %v221, 0
  %236 = vmatprep.subr.mxu0 0.0
  %237 = vmatpush1.msra.mxu0 %v222
  %238 = vmatprep.subr.mxu0 0.0
  %239 = vmatpush1.msra.mxu0 %v223
  %240 = vmatprep.subr.mxu0 0.0
  %241 = vmatpush1.msra.mxu0 %v224
  %242 = vmatprep.subr.mxu0 0.0
  %243 = vmatpush1.msra.mxu0 %v225
  %244 = vmatprep.subr.mxu0 0.0
  %245 = vmatpush1.msra.mxu0 0.0
  %246 = vmatprep.subr.mxu0 0.0
  %247 = vmatpush1.msra.mxu0 0.0
  %248 = vmatprep.subr.mxu0 0.0
  %249 = vmatpush1.msra.mxu0 0.0
  %250 = vmatprep.subr.mxu0 0.0
  %251 = vmatpush1.msra.mxu0 0.0
  %252 = vmatprep.subr.mxu0 0.0
  %253 = vmatpush1.msra.mxu0 0.0
  %254 = vmatprep.subr.mxu0 0.0
  %255 = vmatpush1.msra.mxu0 0.0
  %256 = vmatprep.subr.mxu0 0.0
  %257 = vmatpush1.msra.mxu0 0.0
  %258 = vmatprep.subr.mxu0 0.0
  %259 = vmatpush1.msra.mxu0 0.0
  %260 = vmatprep.subr.mxu0 0.0
  %261 = vmatpush1.msra.mxu0 0.0
  %262 = vmatprep.subr.mxu0 0.0
  %263 = vmatpush1.msra.mxu0 0.0
  %264 = vmatprep.subr.mxu0 0.0
  %265 = vmatpush1.msra.mxu0 0.0
  %266 = vmatprep.subr.mxu0 0.0
  %267 = vmatpush1.msra.mxu0 0.0
  %268 = vmatprep.subr.mxu0 0.0
  %269 = vmatpush1.msra.mxu0 0.0
  %270 = vmatprep.subr.mxu0 0.0
  %271 = vmatpush1.msra.mxu0 0.0
  %272 = vmatprep.subr.mxu0 0.0
  %273 = vmatpush1.msra.mxu0 0.0
  %274 = vmatprep.subr.mxu0 0.0
  %275 = vmatpush1.msra.mxu0 0.0
  %276 = vmatprep.subr.mxu0 0.0
  %277 = vmatpush1.msra.mxu0 0.0
  %278 = vmatprep.subr.mxu0 0.0
  %279 = vmatpush1.msra.mxu0 0.0
  %280 = vmatprep.subr.mxu0 0.0
  %281 = vmatpush1.msra.mxu0 0.0
  %282 = vmatprep.subr.mxu0 0.0
  %283 = vmatpush1.msra.mxu0 0.0
  %284 = vmatprep.subr.mxu0 0.0
  %285 = vmatpush1.msra.mxu0 0.0
  %286 = vmatprep.subr.mxu0 0.0
  %287 = vmatpush1.msra.mxu0 0.0
  %288 = vmatprep.subr.mxu0 0.0
  %289 = vmatpush1.msra.mxu0 0.0
  %290 = vmatprep.subr.mxu0 0.0
  %291 = vmatpush1.msra.mxu0 0.0
  %292 = vmatprep.subr.mxu0 0.0
  %293 = vmatpush1.msra.mxu0 0.0
  %294 = vmatprep.subr.mxu0 0.0
  %295 = vmatpush1.msra.mxu0 0.0
  %296 = vmatprep.subr.mxu0 0.0
  %297 = vmatpush1.msra.mxu0 0.0
  %298 = vmatprep.subr.mxu0 0.0
  %299 = vmatpush1.msra.mxu0 0.0
  %300 = vmatprep.mubr.f32.mxu0 0.0
  %301 = vmatmul.mubr.f32.gmra.mrb[0].mxu0 %v234
  %v302 = vpop.f32.mrb[0].mxu0
  %v303 = vadd.f32 %v231, %v302
  %v304 = vpop.f32.mrb[0].mxu0
  %305 = vdwg.mxu0
  %vm306 = vcmask 15360
  %307 = vst.msk [vmem:[%s9] sm:$0xff] %vm306, %v303
  // Predicated region
  $region38: #{_mlp_forward_impl.1} parent=0 // pred_check
    _
  $region39: #{_mlp_forward_impl.1} parent=0 // pred_check_branch
    %309 = sbr.rel (0) target = $region41
  $region40: #{_mlp_forward_impl.1} parent=0 // pred_region
    _
  $region41: #{_mlp_forward_impl.1} parent=0 // pred_fallthru
    _
  // Predicated region
  $region42: #{_mlp_forward_impl.1} parent=0 // pred_check
    _
  $region43: #{_mlp_forward_impl.1} parent=0 // pred_check_branch
    %311 = sbr.rel (0) target = $region45
  $region44: #{_mlp_forward_impl.1} parent=0 // pred_region
    _
  $region45: #{_mlp_forward_impl.1} parent=0 // pred_fallthru
    _

</llo_original>
